<compile_context>
chip_gen: v6e
topology: v6e:2x2x1
jax: 0.10.0
libtpu: 0.0.40
codegen_flags: <defaults>
</compile_context>

<pallas_src>
import math

import jax
import jax.numpy as jnp
from jax.experimental import pallas as pl
from jax.experimental.pallas import tpu as pltpu

LANE = 128


def pack_params(params, dim):
    """One-time host-side packing of the four Linear layers.

    Weights are [dim, dim] pre-transposed so y = x @ W + b; biases are [dim].
    Returns lane-aligned slabs reused by every simple_cross_attention() call.
    """
    f32 = jnp.float32
    scale = 1.0 / math.sqrt(float(dim))

    def pad_w(w):  # [dim, dim] -> [dim, 128], zero-padded columns
        return jnp.zeros((dim, LANE), f32).at[:, :dim].set(w.astype(f32))

    def pad_b(b):  # [dim] -> [128]
        return jnp.zeros((LANE,), f32).at[:dim].set(b.astype(f32))

    # Segment layout (all 128-lane aligned):
    #   w_slab: [ wq*scale | wv | wk ]            -> [dim, 3*128]
    #   wo_ext: wo embedded in a [128, 128] block (rows/cols >= dim are zero)
    #   b_slab: [ bq*scale | bv | bk | bo ]       -> [1, 4*128]
    w_slab = jnp.concatenate(
        [pad_w(params["wq"].astype(f32) * scale),
         pad_w(params["wv"]),
         pad_w(params["wk"])], axis=1)
    wo_ext = jnp.zeros((LANE, LANE), f32).at[:dim, :dim].set(params["wo"].astype(f32))
    b_slab = jnp.concatenate(
        [pad_b(params["bq"].astype(f32) * scale),
         pad_b(params["bv"]),
         pad_b(params["bk"]),
         pad_b(params["bo"])]).reshape(1, 4 * LANE)
    return {"w_slab": w_slab, "wo_ext": wo_ext, "b_slab": b_slab}


def _cross_attn_kernel(qf_ref, kf_ref, qb_ref, kb_ref, w_ref, wo_ref, b_ref,
                       out_ref, attn_ref):
    qf = qf_ref[...].astype(jnp.float32)          # [Nq, dim]
    kf = kf_ref[...].astype(jnp.float32)          # [Nk_pad, dim]

    # 128-aligned, 128-lane-wide segment views (whole-tile vlds).
    w_q = w_ref[:, 0:LANE]                        # wq*scale, zero-padded lanes
    w_kv = w_ref[:, LANE:3 * LANE]                # [wv | wk], each zero-padded
    b_q = b_ref[:, 0:LANE]
    b_kv = b_ref[:, LANE:3 * LANE]
    b_o = b_ref[:, 3 * LANE:4 * LANE]

    # Projections (MXU, f32 accumulation).  K and V share one fused matmul.
    Q = jnp.dot(qf, w_q, preferred_element_type=jnp.float32) + b_q        # [Nq, 128]
    KV = jnp.dot(kf, w_kv, preferred_element_type=jnp.float32) + b_kv     # [Nk_pad, 256]
    V = KV[:, 0:LANE]                              # lane-0-aligned half -> feeds attn @ V
    K = KV[:, LANE:2 * LANE]                       # 128-aligned half

    # scores = Q @ K^T without materializing K.T: contract last dims of both.
    # Padded lanes (>= dim) of Q and K are zero, so they contribute nothing.
    scores = jax.lax.dot_general(
        Q, K, (((1,), (1,)), ((), ())),
        preferred_element_type=jnp.float32)        # [Nq, Nk_pad]

    # Padded key columns carry batch id -1 (real ids >= 0), so a single compare
    # masks both wrong-batch and padded keys.
    mask = qb_ref[...] == kb_ref[...]
    scores = jnp.where(mask, scores, jnp.float32(-jnp.inf))

    # Stable softmax over keys.  exp(-inf) == 0, so no post-exp select is needed;
    # rows with no valid keys produce exactly 0 (matching nan_to_num(0)).
    m = jnp.max(scores, axis=-1, keepdims=True)
    m_safe = jnp.where(m > -jnp.inf, m, jnp.float32(0.0))
    e = jnp.exp(scores - m_safe)
    denom = jnp.sum(e, axis=-1, keepdims=True)
    denom_safe = jnp.where(denom > 0.0, denom, jnp.float32(1.0))
    attn = e * pl.reciprocal(denom_safe, approx=False)
    attn_ref[...] = attn.astype(attn_ref.dtype)    # lane-dense store [Nq, Nk_pad]

    # attended = out_proj(attn @ V).  ctx's padded lanes are zero and wo_ext's
    # padded rows/cols are zero, so the [128,128] projection is exact.
    ctx = jnp.dot(attn, V, preferred_element_type=jnp.float32)             # [Nq, 128]
    out = jnp.dot(ctx, wo_ref[...], preferred_element_type=jnp.float32) + b_o
    out_ref[...] = out.astype(out_ref.dtype)       # lane-dense store [Nq, 128]


@jax.jit
def simple_cross_attention(q_feat, k_feat, q_batch, k_batch, packed):
    """packed: result of pack_params().  Returns (attended [Nq, dim], attn [Nq, Nk])."""
    Nq, dim = q_feat.shape
    Nk = k_feat.shape[0]
    Nk_pad = max(LANE, pl.cdiv(Nk, LANE) * LANE)

    # Genuinely per-call prep: pad keys along the lane axis; padded batch ids = -1.
    kf_pad = jnp.zeros((Nk_pad, dim), k_feat.dtype).at[:Nk, :].set(k_feat)
    kb_pad = jnp.full((1, Nk_pad), -1, jnp.int32).at[0, :Nk].set(k_batch.astype(jnp.int32))
    qb = q_batch.astype(jnp.int32).reshape(Nq, 1)

    vmem = pl.BlockSpec(memory_space=pltpu.MemorySpace.VMEM)

    out_pad, attn_pad = pl.pallas_call(
        _cross_attn_kernel,
        out_shape=(
            jax.ShapeDtypeStruct((Nq, LANE), q_feat.dtype),
            jax.ShapeDtypeStruct((Nq, Nk_pad), jnp.float32),
        ),
        in_specs=[vmem] * 7,
        out_specs=(vmem, vmem),
    )(q_feat, kf_pad, qb, kb_pad, packed["w_slab"], packed["wo_ext"], packed["b_slab"])

    return out_pad[:, :dim], attn_pad[:, :Nk]


def _init_params(key, dim):
    # xavier_uniform on (dim, dim): bound = sqrt(6 / (fan_in + fan_out))
    bound = math.sqrt(6.0 / (dim + dim))
    keys = jax.random.split(key, 4)
    params = {}
    for k, n in zip(keys, ["q", "k", "v", "o"]):
        params[f"w{n}"] = jax.random.uniform(
            k, (dim, dim), jnp.float32, minval=-bound, maxval=bound)
        params[f"b{n}"] = jnp.zeros((dim,), jnp.float32)
    return params


def _reference(q_feat, k_feat, q_batch, k_batch, params):
    hp = jax.lax.Precision.HIGHEST
    Q = jnp.dot(q_feat, params["wq"], precision=hp) + params["bq"]
    K = jnp.dot(k_feat, params["wk"], precision=hp) + params["bk"]
    V = jnp.dot(k_feat, params["wv"], precision=hp) + params["bv"]
    scores = jnp.dot(Q, K.T, precision=hp) / math.sqrt(Q.shape[-1])
    mask = q_batch[:, None] == k_batch[None, :]
    scores = jnp.where(mask, scores, -jnp.inf)
    m = jnp.max(scores, axis=-1, keepdims=True)
    e = jnp.exp(scores - m)                     # all -inf row -> nan, like torch
    attn = e / jnp.sum(e, axis=-1, keepdims=True)
    attn = jnp.nan_to_num(attn, nan=0.0)
    attended = jnp.dot(jnp.dot(attn, V, precision=hp), params["wo"],
                       precision=hp) + params["bo"]
    return attended, attn


if __name__ == "__main__":
    key = jax.random.PRNGKey(0)
    k_feat_key, q_feat_key, param_key = jax.random.split(key, 3)

    dim = 32
    Nq, Nk = 8, 16

    q_feat = jax.random.normal(q_feat_key, (Nq, dim), jnp.float32)
    k_feat = jax.random.normal(k_feat_key, (Nk, dim), jnp.float32)
    # Batch id 2 has queries but no keys -> exercises the nan_to_num(0) path.
    q_batch = jnp.array([0, 0, 0, 0, 1, 1, 1, 2], jnp.int32)
    k_batch = jnp.array([0] * 8 + [1] * 8, jnp.int32)

    params = _init_params(param_key, dim)
    packed = pack_params(params, dim)           # one-time packing, reused per call

    attended, attn = simple_cross_attention(q_feat, k_feat, q_batch, k_batch, packed)
    jax.block_until_ready((attended, attn))

    ref_attended, ref_attn = _reference(q_feat, k_feat, q_batch, k_batch, params)
    assert jnp.allclose(attended, ref_attended, atol=1e-4, rtol=1e-4)
    assert jnp.allclose(attn, ref_attn, atol=1e-5, rtol=1e-5)

    print("KERNEL_OK")
</pallas_src>

<mosaic_0001>
module attributes {stable_mosaic.version = 11 : i64} {
  func.func @_cross_attn_kernel(%arg0: memref<8x32xf32, #tpu.memory_space<vmem>>, %arg1: memref<128x32xf32, #tpu.memory_space<vmem>>, %arg2: memref<8x1xi32, #tpu.memory_space<vmem>>, %arg3: memref<1x128xi32, #tpu.memory_space<vmem>>, %arg4: memref<32x384xf32, #tpu.memory_space<vmem>>, %arg5: memref<128x128xf32, #tpu.memory_space<vmem>>, %arg6: memref<1x512xf32, #tpu.memory_space<vmem>>, %arg7: memref<8x128xf32, #tpu.memory_space<vmem>>, %arg8: memref<8x128xf32, #tpu.memory_space<vmem>>) attributes {dimension_semantics = [], scalar_prefetch = 0 : i64, scratch_operands = 0 : i64, tpu.core_type = #tpu.core_type<tc>} {
    %c0 = arith.constant 0 : index
    %c0_0 = arith.constant 0 : index
    %0 = vector.load %arg0[%c0, %c0_0] : memref<8x32xf32, #tpu.memory_space<vmem>>, vector<8x32xf32>
    %c0_1 = arith.constant 0 : index
    %c0_2 = arith.constant 0 : index
    %1 = vector.load %arg1[%c0_1, %c0_2] : memref<128x32xf32, #tpu.memory_space<vmem>>, vector<128x32xf32>
    %c0_3 = arith.constant 0 : index
    %c0_4 = arith.constant 0 : index
    %2 = vector.load %arg4[%c0_3, %c0_4] : memref<32x384xf32, #tpu.memory_space<vmem>>, vector<32x128xf32>
    %c0_5 = arith.constant 0 : index
    %c128 = arith.constant 128 : index
    %3 = vector.load %arg4[%c0_5, %c128] : memref<32x384xf32, #tpu.memory_space<vmem>>, vector<32x256xf32>
    %c0_6 = arith.constant 0 : index
    %c0_7 = arith.constant 0 : index
    %4 = vector.load %arg6[%c0_6, %c0_7] : memref<1x512xf32, #tpu.memory_space<vmem>>, vector<1x128xf32>
    %c0_8 = arith.constant 0 : index
    %c128_9 = arith.constant 128 : index
    %5 = vector.load %arg6[%c0_8, %c128_9] : memref<1x512xf32, #tpu.memory_space<vmem>>, vector<1x256xf32>
    %c0_10 = arith.constant 0 : index
    %c384 = arith.constant 384 : index
    %6 = vector.load %arg6[%c0_10, %c384] : memref<1x512xf32, #tpu.memory_space<vmem>>, vector<1x128xf32>
    %cst = arith.constant dense<0.000000e+00> : vector<8x128xf32>
    %7 = tpu.matmul %0, %2, %cst {dimension_numbers = #tpu.dot_dimension_numbers<[1], [0], [0], [1], [0, 0, 1, 1], [], []>} : vector<8x32xf32>, vector<32x128xf32>, vector<8x128xf32> -> vector<8x128xf32>
    %8 = vector.broadcast %4 : vector<1x128xf32> to vector<8x128xf32>
    %9 = arith.addf %7, %8 : vector<8x128xf32>
    %cst_11 = arith.constant dense<0.000000e+00> : vector<128x256xf32>
    %10 = tpu.matmul %1, %3, %cst_11 {dimension_numbers = #tpu.dot_dimension_numbers<[1], [0], [0], [1], [0, 0, 1, 1], [], []>} : vector<128x32xf32>, vector<32x256xf32>, vector<128x256xf32> -> vector<128x256xf32>
    %11 = vector.broadcast %5 : vector<1x256xf32> to vector<128x256xf32>
    %12 = arith.addf %10, %11 : vector<128x256xf32>
    %13 = vector.extract_strided_slice %12 {offsets = [0, 0], sizes = [128, 128], strides = [1, 1]} : vector<128x256xf32> to vector<128x128xf32>
    %14 = vector.extract_strided_slice %12 {offsets = [0, 128], sizes = [128, 128], strides = [1, 1]} : vector<128x256xf32> to vector<128x128xf32>
    %cst_12 = arith.constant dense<0.000000e+00> : vector<8x128xf32>
    %15 = tpu.matmul %9, %14, %cst_12 {dimension_numbers = #tpu.dot_dimension_numbers<[1], [1], [0], [0], [0, 0, 1, 0], [], []>} : vector<8x128xf32>, vector<128x128xf32>, vector<8x128xf32> -> vector<8x128xf32>
    %c0_13 = arith.constant 0 : index
    %c0_14 = arith.constant 0 : index
    %16 = vector.load %arg2[%c0_13, %c0_14] : memref<8x1xi32, #tpu.memory_space<vmem>>, vector<8x1xi32>
    %c0_15 = arith.constant 0 : index
    %c0_16 = arith.constant 0 : index
    %17 = vector.load %arg3[%c0_15, %c0_16] : memref<1x128xi32, #tpu.memory_space<vmem>>, vector<1x128xi32>
    %18 = vector.broadcast %16 : vector<8x1xi32> to vector<8x128xi32>
    %19 = vector.broadcast %17 : vector<1x128xi32> to vector<8x128xi32>
    %20 = arith.cmpi eq, %18, %19 : vector<8x128xi32>
    %cst_17 = arith.constant 0xFF800000 : f32
    %21 = vector.broadcast %cst_17 : f32 to vector<8x128xf32>
    %22 = arith.select %20, %15, %21 : vector<8x128xi1>, vector<8x128xf32>
    %cst_18 = arith.constant dense<0xFF800000> : vector<8xf32>
    %23 = vector.multi_reduction <maximumf>, %22, %cst_18 [1] : vector<8x128xf32> to vector<8xf32>
    %24 = vector.shape_cast %23 : vector<8xf32> to vector<8x1xf32>
    %cst_19 = arith.constant 0xFF800000 : f32
    %25 = vector.broadcast %cst_19 : f32 to vector<8x1xf32>
    %26 = arith.cmpf ogt, %24, %25 : vector<8x1xf32>
    %cst_20 = arith.constant 0.000000e+00 : f32
    %27 = vector.broadcast %cst_20 : f32 to vector<8x1xf32>
    %28 = arith.select %26, %24, %27 : vector<8x1xi1>, vector<8x1xf32>
    %29 = vector.broadcast %28 : vector<8x1xf32> to vector<8x128xf32>
    %30 = arith.subf %22, %29 : vector<8x128xf32>
    %31 = math.exp %30 : vector<8x128xf32>
    %cst_21 = arith.constant dense<0.000000e+00> : vector<8xf32>
    %32 = vector.multi_reduction <add>, %31, %cst_21 [1] : vector<8x128xf32> to vector<8xf32>
    %33 = vector.shape_cast %32 : vector<8xf32> to vector<8x1xf32>
    %cst_22 = arith.constant 0.000000e+00 : f32
    %34 = vector.broadcast %cst_22 : f32 to vector<8x1xf32>
    %35 = arith.cmpf ogt, %33, %34 : vector<8x1xf32>
    %cst_23 = arith.constant 1.000000e+00 : f32
    %36 = vector.broadcast %cst_23 : f32 to vector<8x1xf32>
    %37 = arith.select %35, %33, %36 : vector<8x1xi1>, vector<8x1xf32>
    %38 = tpu.reciprocal %37 : vector<8x1xf32> -> vector<8x1xf32>
    %39 = vector.broadcast %38 : vector<8x1xf32> to vector<8x128xf32>
    %40 = arith.mulf %31, %39 : vector<8x128xf32>
    %c0_24 = arith.constant 0 : index
    %c0_25 = arith.constant 0 : index
    %41 = vector.load %arg8[%c0_24, %c0_25] : memref<8x128xf32, #tpu.memory_space<vmem>>, vector<8x128xf32>
    tpu.vector_store %arg8[%c0_24, %c0_25], %40 {strides = array<i32>} : memref<8x128xf32, #tpu.memory_space<vmem>>, vector<8x128xf32>,
    %cst_26 = arith.constant dense<0.000000e+00> : vector<8x128xf32>
    %42 = tpu.matmul %40, %13, %cst_26 {dimension_numbers = #tpu.dot_dimension_numbers<[1], [0], [0], [1], [0, 0, 1, 1], [], []>} : vector<8x128xf32>, vector<128x128xf32>, vector<8x128xf32> -> vector<8x128xf32>
    %c0_27 = arith.constant 0 : index
    %c0_28 = arith.constant 0 : index
    %43 = vector.load %arg5[%c0_27, %c0_28] : memref<128x128xf32, #tpu.memory_space<vmem>>, vector<128x128xf32>
    %cst_29 = arith.constant dense<0.000000e+00> : vector<8x128xf32>
    %44 = tpu.matmul %42, %43, %cst_29 {dimension_numbers = #tpu.dot_dimension_numbers<[1], [0], [0], [1], [0, 0, 1, 1], [], []>} : vector<8x128xf32>, vector<128x128xf32>, vector<8x128xf32> -> vector<8x128xf32>
    %45 = vector.broadcast %6 : vector<1x128xf32> to vector<8x128xf32>
    %46 = arith.addf %44, %45 : vector<8x128xf32>
    %c0_30 = arith.constant 0 : index
    %c0_31 = arith.constant 0 : index
    %47 = vector.load %arg7[%c0_30, %c0_31] : memref<8x128xf32, #tpu.memory_space<vmem>>, vector<8x128xf32>
    tpu.vector_store %arg7[%c0_30, %c0_31], %46 {strides = array<i32>} : memref<8x128xf32, #tpu.memory_space<vmem>>, vector<8x128xf32>,
    return
  }
}

</mosaic_0001>

<llo_original>
// kernel: simple_cross_attention.1
$region0: #{simple_cross_attention.1}
  #allocation0 [shape = 'u32[]', space=smem, size = 0x4, offset = 0x4, fixed_abs, tag = 'smem constant byte address 0x4 - core index']
  #allocation1 [shape = 'u32[144,128]{1,0:T(1,128)}', space=vmem, size = 0x12000, scoped, tag = 'internal scratch']
  %s0 = inlined_call_operand.vmem [shape: f32[8,32], index: 0, kind: input, shape index: {}]
  %s1 = inlined_call_operand.vmem [shape: f32[128,32], index: 1, kind: input, shape index: {}]
  %s2 = inlined_call_operand.vmem [shape: s32[8,1], index: 2, kind: input, shape index: {}]
  %s3 = inlined_call_operand.vmem [shape: s32[1,128], index: 3, kind: input, shape index: {}]
  %s4 = inlined_call_operand.hbm [shape: f32[32,384], index: 4, kind: input, shape index: {}]
  %s5 = inlined_call_operand.vmem [shape: f32[128,128], index: 5, kind: input, shape index: {}]
  %s6 = inlined_call_operand.vmem [shape: f32[1,512], index: 6, kind: input, shape index: {}]
  %s7 = inlined_call_operand.hbm [shape: f32[8,128], index: 7, kind: output, shape index: {0}]
  %s8 = inlined_call_operand.hbm [shape: f32[8,128], index: 8, kind: output, shape index: {1}]
  %9 = xla_tuple %s7, %s8
  %s10 = sld [smem:[#allocation0]]
  $region50: #{simple_cross_attention.1} parent=0
    _
  %s12 = ssub.s32 1, %s10
  %s13 = scalar_select 0, %s12, %s10
  $region1: #{simple_cross_attention.1} parent=0
    #allocation2 [shape = 'u8[49152]{0}', space=vmem, size = 0xc000, scoped, tag = 'input window, operand 4, single buffered']
    #allocation3 [shape = 's32[1]{0}', space=sflag, size = 0x4, scoped, tag = 'scoped memory for simple_cross_attention.1']
    #allocation4 [shape = 's32[1]{0}', space=sflag, size = 0x4, scoped, tag = 'scoped memory for simple_cross_attention.1']
    #allocation5 [shape = 'u8[4096]{0}', space=vmem, size = 0x1000, scoped, tag = 'output window, operand 0, single buffered']
    #allocation6 [shape = 'u8[4096]{0}', space=vmem, size = 0x1000, scoped, tag = 'output window, operand 1, single buffered']
    #allocation7 [shape = 's32[1]{0}', space=sflag, size = 0x4, scoped, tag = 'scoped memory for simple_cross_attention.1']
    %14 = vsyncpa [#allocation3], 0
    %15 = vsyncpa [#allocation4], 0
    %16 = vsyncpa [#allocation7], 0
    // Predicated region
    $region2: #{simple_cross_attention.1} parent=1 // pred_check
      _
    $region3: #{simple_cross_attention.1} parent=1 // pred_check_branch
      %18 = sbr.rel (0) target = $region5
    $region4: #{simple_cross_attention.1} parent=1 // pred_region
      _
    $region5: #{simple_cross_attention.1} parent=1 // pred_fallthru
      _
    // Predicated region
    $region6: #{simple_cross_attention.1} parent=1 // pred_check
      _
    $region7: #{simple_cross_attention.1} parent=1 // pred_check_branch
      %20 = sbr.rel (0) target = $region9
    $region8: #{simple_cross_attention.1} parent=1 // pred_region
      _
    $region9: #{simple_cross_attention.1} parent=1 // pred_fallthru
      _
    // Predicated region
    $region10: #{simple_cross_attention.1} parent=1 // pred_check
      _
    $region11: #{simple_cross_attention.1} parent=1 // pred_check_branch
      %22 = sbr.rel (0) target = $region13
    $region12: #{simple_cross_attention.1} parent=1 // pred_region
      _
    $region13: #{simple_cross_attention.1} parent=1 // pred_fallthru
      _
    // Predicated region
    $region14: #{simple_cross_attention.1} parent=1 // pred_check
      _
    $region15: #{simple_cross_attention.1} parent=1 // pred_check_branch
      %24 = sbr.rel (0) target = $region17
    $region16: #{simple_cross_attention.1} parent=1 // pred_region
      _
    $region17: #{simple_cross_attention.1} parent=1 // pred_fallthru
      _
    // Predicated region
    $region18: #{simple_cross_attention.1} parent=1 // pred_check
      _
    $region19: #{simple_cross_attention.1} parent=1 // pred_check_branch
      %26 = sbr.rel (0) target = $region21
    $region20: #{simple_cross_attention.1} parent=1 // pred_region
      %s28 = ssub.s32 1536, 1536
      %29 = vsyncadd [#allocation3], %s28
      %s30 = sshll.u32 [#allocation2], 4
      %s31 = int_to_ptr.vmem [resolvable:$true] %s30
      %36 = dma.hbm_to_vmem [thread:$0]  %s4, 1536, %s31, [#allocation3], 384, 384, 24
    $region21: #{simple_cross_attention.1} parent=1 // pred_fallthru
      _
    // Predicated region
    $region22: #{simple_cross_attention.1} parent=1 // pred_check
      _
    $region23: #{simple_cross_attention.1} parent=1 // pred_check_branch
      %38 = sbr.rel (0) target = $region25
    $region24: #{simple_cross_attention.1} parent=1 // pred_region
      _
    $region25: #{simple_cross_attention.1} parent=1 // pred_fallthru
      _
    // Predicated region
    $region26: #{simple_cross_attention.1} parent=1 // pred_check
      _
    $region27: #{simple_cross_attention.1} parent=1 // pred_check_branch
      %40 = sbr.rel (0) target = $region29
    $region28: #{simple_cross_attention.1} parent=1 // pred_region
      _
    $region29: #{simple_cross_attention.1} parent=1 // pred_fallthru
      _
    // Predicated region
    $region30: #{simple_cross_attention.1} parent=1 // pred_check
      _
    $region31: #{simple_cross_attention.1} parent=1 // pred_check_branch
      %42 = sbr.rel (0) target = $region33
    $region32: #{simple_cross_attention.1} parent=1 // pred_region
      %43 = dma.done [#allocation3], 1536
    $region33: #{simple_cross_attention.1} parent=1 // pred_fallthru
      _
    %v44 = vld [vmem:[%s0] sm:$0xff]
    %v45 = vld [vmem:[%s1] sm:$0xff]
    %v46 = vld [vmem:[%s1 + $0x8] sm:$0xff]
    %v47 = vld [vmem:[%s1 + $0x10] sm:$0xff]
    %v48 = vld [vmem:[%s1 + $0x18] sm:$0xff]
    %v49 = vld [vmem:[%s1 + $0x20] sm:$0xff]
    %v50 = vld [vmem:[%s1 + $0x28] sm:$0xff]
    %v51 = vld [vmem:[%s1 + $0x30] sm:$0xff]
    %v52 = vld [vmem:[%s1 + $0x38] sm:$0xff]
    %v53 = vld [vmem:[%s1 + $0x40] sm:$0xff]
    %v54 = vld [vmem:[%s1 + $0x48] sm:$0xff]
    %v55 = vld [vmem:[%s1 + $0x50] sm:$0xff]
    %v56 = vld [vmem:[%s1 + $0x58] sm:$0xff]
    %v57 = vld [vmem:[%s1 + $0x60] sm:$0xff]
    %v58 = vld [vmem:[%s1 + $0x68] sm:$0xff]
    %v59 = vld [vmem:[%s1 + $0x70] sm:$0xff]
    %v60 = vld [vmem:[%s1 + $0x78] sm:$0xff]
    %v61 = vld [vmem:[#allocation2] sm:$0xff]
    %v62 = vld [vmem:[#allocation2 + $0x18] sm:$0xff]
    %v63 = vld [vmem:[#allocation2 + $0x30] sm:$0xff]
    %v64 = vld [vmem:[#allocation2 + $0x48] sm:$0xff]
    %v65 = vld [vmem:[#allocation2 + $0x8] sm:$0xff]
    %v66 = vld [vmem:[#allocation2 + $0x10] sm:$0xff]
    %v67 = vld [vmem:[#allocation2 + $0x20] sm:$0xff]
    %v68 = vld [vmem:[#allocation2 + $0x28] sm:$0xff]
    %v69 = vld [vmem:[#allocation2 + $0x38] sm:$0xff]
    %v70 = vld [vmem:[#allocation2 + $0x40] sm:$0xff]
    %v71 = vld [vmem:[#allocation2 + $0x50] sm:$0xff]
    %v72 = vld [vmem:[#allocation2 + $0x58] sm:$0xff]
    %v73 = vld [vmem:[%s6] sm:$0x1]
    %v74 = vld [vmem:[%s6 + $0x1] sm:$0x3]
    %v75 = vld [vmem:[%s6 + $0x3] sm:$0x1]
    %v77 = vlaneseq
    %v78 = vshrl.u32 %v77, 7
    %v79 = vsub.s32 0, %v78
    %v80 = vrot.slane %v73, %v79
    %vm82 = vcmask 261120
    %v84 = vsel %vm82, %v44, 0
    %86 = vmatprep.subr.mxu0 0.0
    %87 = vmatpush1.msra.mxu0 0.0
    %88 = vmatprep.subr.mxu0 0.0
    %89 = vmatpush1.msra.mxu0 0.0
    %90 = vmatprep.subr.mxu0 0.0
    %91 = vmatpush1.msra.mxu0 0.0
    %92 = vmatprep.subr.mxu0 0.0
    %93 = vmatpush1.msra.mxu0 0.0
    %94 = vmatprep.subr.mxu0 0.0
    %95 = vmatpush1.msra.mxu0 0.0
    %96 = vmatprep.subr.mxu0 0.0
    %97 = vmatpush1.msra.mxu0 0.0
    %98 = vmatprep.subr.mxu0 0.0
    %99 = vmatpush1.msra.mxu0 0.0
    %100 = vmatprep.subr.mxu0 0.0
    %101 = vmatpush1.msra.mxu0 0.0
    %102 = vmatprep.subr.mxu0 0.0
    %103 = vmatpush1.msra.mxu0 0.0
    %104 = vmatprep.subr.mxu0 0.0
    %105 = vmatpush1.msra.mxu0 0.0
    %106 = vmatprep.subr.mxu0 0.0
    %107 = vmatpush1.msra.mxu0 0.0
    %108 = vmatprep.subr.mxu0 0.0
    %109 = vmatpush1.msra.mxu0 0.0
    %110 = vmatprep.subr.mxu0 0.0
    %111 = vmatpush1.msra.mxu0 %v64
    %112 = vmatprep.subr.mxu0 0.0
    %113 = vmatpush1.msra.mxu0 %v63
    %114 = vmatprep.subr.mxu0 0.0
    %115 = vmatpush1.msra.mxu0 %v62
    %116 = vmatprep.subr.mxu0 0.0
    %117 = vmatpush1.msra.mxu0 %v61
    %118 = vmatprep.subr.mxu0 0.0
    %119 = vmatpush2.msra.mxu0 0.0
    %120 = vmatprep.subr.mxu0 0.0
    %121 = vmatpush2.msra.mxu0 0.0
    %122 = vmatprep.subr.mxu0 0.0
    %123 = vmatpush2.msra.mxu0 0.0
    %124 = vmatprep.subr.mxu0 0.0
    %125 = vmatpush2.msra.mxu0 0.0
    %126 = vmatprep.subr.mxu0 0.0
    %127 = vmatpush2.msra.mxu0 0.0
    %128 = vmatprep.subr.mxu0 0.0
    %129 = vmatpush2.msra.mxu0 0.0
    %130 = vmatprep.subr.mxu0 0.0
    %131 = vmatpush2.msra.mxu0 0.0
    %132 = vmatprep.subr.mxu0 0.0
    %133 = vmatpush2.msra.mxu0 0.0
    %134 = vmatprep.subr.mxu0 0.0
    %135 = vmatpush2.msra.mxu0 0.0
    %136 = vmatprep.subr.mxu0 0.0
    %137 = vmatpush2.msra.mxu0 0.0
    %138 = vmatprep.subr.mxu0 0.0
    %139 = vmatpush2.msra.mxu0 0.0
    %140 = vmatprep.subr.mxu0 0.0
    %141 = vmatpush2.msra.mxu0 0.0
    %142 = vmatprep.subr.mxu0 0.0
    %143 = vmatpush2.msra.mxu0 0.0
    %144 = vmatprep.subr.mxu0 0.0
    %145 = vmatpush2.msra.mxu0 0.0
    %146 = vmatprep.subr.mxu0 0.0
    %147 = vmatpush2.msra.mxu0 0.0
    %148 = vmatprep.subr.mxu0 0.0
    %149 = vmatpush2.msra.mxu0 0.0
    %150 = vmatprep.mubr.f32.mxu0 0.0
    %151 = vmatmul.mubr.f32.gmra.mxu0 %v84
    %v152 = vpop.f32.mrf.mxu0
    %v153 = vadd.f32 %v80, %v152
    %v154 = vpop.f32.mrf.mxu0
    %155 = vdwg.mxu0
    %v157 = vlaneseq
    %v158 = vshrl.u32 %v157, 7
    %v159 = vsub.s32 0, %v158
    %v160 = vrot.slane %v74, %v159
    %v161 = vlaneseq
    %v162 = vshrl.u32 %v161, 7
    %v163 = vsub.s32 1, %v162
    %v164 = vrot.slane %v74, %v163
    %v168 = vsel %vm82, %v45, 0
    %v171 = vsel %vm82, %v46, 0
    %v174 = vsel %vm82, %v47, 0
    %v177 = vsel %vm82, %v48, 0
    %v180 = vsel %vm82, %v49, 0
    %v183 = vsel %vm82, %v50, 0
    %v186 = vsel %vm82, %v51, 0
    %v189 = vsel %vm82, %v52, 0
    %v192 = vsel %vm82, %v53, 0
    %v195 = vsel %vm82, %v54, 0
    %v198 = vsel %vm82, %v55, 0
    %v201 = vsel %vm82, %v56, 0
    %v204 = vsel %vm82, %v57, 0
    %v207 = vsel %vm82, %v58, 0
    %v210 = vsel %vm82, %v59, 0
    %v213 = vsel %vm82, %v60, 0
    %215 = vmatprep.subr.mxu0 0.0
    %216 = vmatpush1.msra.mxu0 0.0
    %217 = vmatprep.subr.mxu0 0.0
    %218 = vmatpush1.msra.mxu0 0.0
    %219 = vmatprep.subr.mxu0 0.0
    %220 = vmatpush1.msra.mxu0 0.0
    %221 = vmatprep.subr.mxu0 0.0
    %222 = vmatpush1.msra.mxu0 0.0
    %223 = vmatprep.subr.mxu0 0.0
    %224 = vmatpush1.msra.mxu0 0.0
    %225 = vmatprep.subr.mxu0 0.0
    %226 = vmatpush1.msra.mxu0 0.0
    %227 = vmatprep.subr.mxu0 0.0
    %228 = vmatpush1.msra.mxu0 0.0
    %229 = vmatprep.subr.mxu0 0.0
    %230 = vmatpush1.msra.mxu0 0.0
    %231 = vmatprep.subr.mxu0 0.0
    %232 = vmatpush1.msra.mxu0 0.0
    %233 = vmatprep.subr.mxu0 0.0
    %234 = vmatpush1.msra.mxu0 0.0
    %235 = vmatprep.subr.mxu0 0.0
    %236 = vmatpush1.msra.mxu0 0.0
    %237 = vmatprep.subr.mxu0 0.0
    %238 = vmatpush1.msra.mxu0 0.0
    %239 = vmatprep.subr.mxu0 %v72
    %240 = vmatpush1.msra.mxu0 %v71
    %241 = vmatprep.subr.mxu0 %v70
    %242 = vmatpush1.msra.mxu0 %v69
    %243 = vmatprep.subr.mxu0 %v68
    %244 = vmatpush1.msra.mxu0 %v67
    %245 = vmatprep.subr.mxu0 %v66
    %246 = vmatpush1.msra.mxu0 %v65
    %247 = vmatprep.subr.mxu0 0.0
    %248 = vmatpush2.msra.mxu0 0.0
    %249 = vmatprep.subr.mxu0 0.0
    %250 = vmatpush2.msra.mxu0 0.0
    %251 = vmatprep.subr.mxu0 0.0
    %252 = vmatpush2.msra.mxu0 0.0
    %253 = vmatprep.subr.mxu0 0.0
    %254 = vmatpush2.msra.mxu0 0.0
    %255 = vmatprep.subr.mxu0 0.0
    %256 = vmatpush2.msra.mxu0 0.0
    %257 = vmatprep.subr.mxu0 0.0
    %258 = vmatpush2.msra.mxu0 0.0
    %259 = vmatprep.subr.mxu0 0.0
    %260 = vmatpush2.msra.mxu0 0.0
    %261 = vmatprep.subr.mxu0 0.0
    %262 = vmatpush2.msra.mxu0 0.0
    %263 = vmatprep.subr.mxu0 0.0
    %264 = vmatpush2.msra.mxu0 0.0
    %265 = vmatprep.subr.mxu0 0.0
    %266 = vmatpush2.msra.mxu0 0.0
    %267 = vmatprep.subr.mxu0 0.0
    %268 = vmatpush2.msra.mxu0 0.0
    %269 = vmatprep.subr.mxu0 0.0
    %270 = vmatpush2.msra.mxu0 0.0
    %271 = vmatprep.subr.mxu0 0.0
    %272 = vmatpush2.msra.mxu0 0.0
    %273 = vmatprep.subr.mxu0 0.0
    %274 = vmatpush2.msra.mxu0 0.0
    %275 = vmatprep.subr.mxu0 0.0
    %276 = vmatpush2.msra.mxu0 0.0
    %277 = vmatprep.subr.mxu0 0.0
    %278 = vmatpush2.msra.mxu0 0.0
    %279 = vmatprep.mubr.f32.mxu0 0.0
    %280 = vmatmul.mubr.f32.gmra.mxu0 %v168
    %v281 = vpop.f32.mrf.mxu0
    %v282 = vadd.f32 %v160, %v281
    %v283 = vpop.f32.mrf.mxu0
    %v284 = vadd.f32 %v164, %v283
    %285 = vmatprep.mubr.f32.mxu0 0.0
    %286 = vmatmul.mubr.f32.gmra.mxu0 %v171
    %v287 = vpop.f32.mrf.mxu0
    %v288 = vadd.f32 %v160, %v287
    %v289 = vpop.f32.mrf.mxu0
    %v290 = vadd.f32 %v164, %v289
    %291 = vmatprep.mubr.f32.mxu0 0.0
    %292 = vmatmul.mubr.f32.gmra.mxu0 %v174
    %v293 = vpop.f32.mrf.mxu0
    %v294 = vadd.f32 %v160, %v293
    %v295 = vpop.f32.mrf.mxu0
    %v296 = vadd.f32 %v164, %v295
    %297 = vmatprep.mubr.f32.mxu0 0.0
    %298 = vmatmul.mubr.f32.gmra.mxu0 %v177
    %v299 = vpop.f32.mrf.mxu0
    %v300 = vadd.f32 %v160, %v299
    %v301 = vpop.f32.mrf.mxu0
    %v302 = vadd.f32 %v164, %v301
    %303 = vmatprep.mubr.f32.mxu0 0.0
    %304 = vmatmul.mubr.f32.gmra.mxu0 %v180
    %v305 = vpop.f32.mrf.mxu0
    %v306 = vadd.f32 %v160, %v305
    %v307 = vpop.f32.mrf.mxu0
    %v308 = vadd.f32 %v164, %v307
    %309 = vmatprep.mubr.f32.mxu0 0.0
    %310 = vmatmul.mubr.f32.gmra.mxu0 %v183
    %v311 = vpop.f32.mrf.mxu0
    %v312 = vadd.f32 %v160, %v311
    %v313 = vpop.f32.mrf.mxu0
    %v314 = vadd.f32 %v164, %v313
    %315 = vmatprep.mubr.f32.mxu0 0.0
    %316 = vmatmul.mubr.f32.gmra.mxu0 %v186
    %v317 = vpop.f32.mrf.mxu0
    %v318 = vadd.f32 %v160, %v317
    %v319 = vpop.f32.mrf.mxu0
    %v320 = vadd.f32 %v164, %v319
    %321 = vmatprep.mubr.f32.mxu0 0.0
    %322 = vmatmul.mubr.f32.gmra.mxu0 %v189
    %v323 = vpop.f32.mrf.mxu0
    %v324 = vadd.f32 %v160, %v323
    %v325 = vpop.f32.mrf.mxu0
    %v326 = vadd.f32 %v164, %v325
    %327 = vmatprep.mubr.f32.mxu0 0.0
    %328 = vmatmul.mubr.f32.gmra.mxu0 %v192
    %v329 = vpop.f32.mrf.mxu0
    %v330 = vadd.f32 %v160, %v329
    %v331 = vpop.f32.mrf.mxu0
    %v332 = vadd.f32 %v164, %v331
    %333 = vmatprep.mubr.f32.mxu0 0.0
    %334 = vmatmul.mubr.f32.gmra.mxu0 %v195
    %v335 = vpop.f32.mrf.mxu0
    %v336 = vadd.f32 %v160, %v335
    %v337 = vpop.f32.mrf.mxu0
    %v338 = vadd.f32 %v164, %v337
    %339 = vmatprep.mubr.f32.mxu0 0.0
    %340 = vmatmul.mubr.f32.gmra.mxu0 %v198
    %v341 = vpop.f32.mrf.mxu0
    %v342 = vadd.f32 %v160, %v341
    %v343 = vpop.f32.mrf.mxu0
    %v344 = vadd.f32 %v164, %v343
    %345 = vmatprep.mubr.f32.mxu0 0.0
    %346 = vmatmul.mubr.f32.gmra.mxu0 %v201
    %v347 = vpop.f32.mrf.mxu0
    %v348 = vadd.f32 %v160, %v347
    %v349 = vpop.f32.mrf.mxu0
    %v350 = vadd.f32 %v164, %v349
    %351 = vmatprep.mubr.f32.mxu0 0.0
    %352 = vmatmul.mubr.f32.gmra.mxu0 %v204
    %v353 = vpop.f32.mrf.mxu0
    %v354 = vadd.f32 %v160, %v353
    %v355 = vpop.f32.mrf.mxu0
    %v356 = vadd.f32 %v164, %v355
    %357 = vmatprep.mubr.f32.mxu0 0.0
    %358 = vmatmul.mubr.f32.gmra.mxu0 %v207
    %v359 = vpop.f32.mrf.mxu0
    %v360 = vadd.f32 %v160, %v359
    %v361 = vpop.f32.mrf.mxu0
    %v362 = vadd.f32 %v164, %v361
    %363 = vmatprep.mubr.f32.mxu0 0.0
    %364 = vmatmul.mubr.f32.gmra.mxu0 %v210
    %v365 = vpop.f32.mrf.mxu0
    %v366 = vadd.f32 %v160, %v365
    %v367 = vpop.f32.mrf.mxu0
    %v368 = vadd.f32 %v164, %v367
    %369 = vmatprep.mubr.f32.mxu0 0.0
    %370 = vmatmul.mubr.f32.gmra.mxu0 %v213
    %v371 = vpop.f32.mrf.mxu0
    %v372 = vadd.f32 %v160, %v371
    %v373 = vpop.f32.mrf.mxu0
    %v374 = vadd.f32 %v164, %v373
    %375 = vdwg.mxu0
    %376 = vmatprep.subr.mxu0 0.0
    %377 = vmatpush1.xpose.msra.mxu0 %v374
    %378 = vmatprep.subr.mxu0 0.0
    %379 = vmatpush1.xpose.msra.mxu0 %v368
    %380 = vmatprep.subr.mxu0 0.0
    %381 = vmatpush1.xpose.msra.mxu0 %v362
    %382 = vmatprep.subr.mxu0 0.0
    %383 = vmatpush1.xpose.msra.mxu0 %v356
    %384 = vmatprep.subr.mxu0 0.0
    %385 = vmatpush1.xpose.msra.mxu0 %v350
    %386 = vmatprep.subr.mxu0 0.0
    %387 = vmatpush1.xpose.msra.mxu0 %v344
    %388 = vmatprep.subr.mxu0 0.0
    %389 = vmatpush1.xpose.msra.mxu0 %v338
    %390 = vmatprep.subr.mxu0 0.0
    %391 = vmatpush1.xpose.msra.mxu0 %v332
    %392 = vmatprep.subr.mxu0 0.0
    %393 = vmatpush1.xpose.msra.mxu0 %v326
    %394 = vmatprep.subr.mxu0 0.0
    %395 = vmatpush1.xpose.msra.mxu0 %v320
    %396 = vmatprep.subr.mxu0 0.0
    %397 = vmatpush1.xpose.msra.mxu0 %v314
    %398 = vmatprep.subr.mxu0 0.0
    %399 = vmatpush1.xpose.msra.mxu0 %v308
    %400 = vmatprep.subr.mxu0 0.0
    %401 = vmatpush1.xpose.msra.mxu0 %v302
    %402 = vmatprep.subr.mxu0 0.0
    %403 = vmatpush1.xpose.msra.mxu0 %v296
    %404 = vmatprep.subr.mxu0 0.0
    %405 = vmatpush1.xpose.msra.mxu0 %v290
    %406 = vmatprep.subr.mxu0 0.0
    %407 = vmatpush1.xpose.msra.mxu0 %v284
    %408 = vmatprep.subr.mxu0 0.0
    %409 = vmatpush2.xpose.msra.mxu0 0.0
    %410 = vmatprep.subr.mxu0 0.0
    %411 = vmatpush2.xpose.msra.mxu0 0.0
    %412 = vmatprep.subr.mxu0 0.0
    %413 = vmatpush2.xpose.msra.mxu0 0.0
    %414 = vmatprep.subr.mxu0 0.0
    %415 = vmatpush2.xpose.msra.mxu0 0.0
    %416 = vmatprep.subr.mxu0 0.0
    %417 = vmatpush2.xpose.msra.mxu0 0.0
    %418 = vmatprep.subr.mxu0 0.0
    %419 = vmatpush2.xpose.msra.mxu0 0.0
    %420 = vmatprep.subr.mxu0 0.0
    %421 = vmatpush2.xpose.msra.mxu0 0.0
    %422 = vmatprep.subr.mxu0 0.0
    %423 = vmatpush2.xpose.msra.mxu0 0.0
    %424 = vmatprep.subr.mxu0 0.0
    %425 = vmatpush2.xpose.msra.mxu0 0.0
    %426 = vmatprep.subr.mxu0 0.0
    %427 = vmatpush2.xpose.msra.mxu0 0.0
    %428 = vmatprep.subr.mxu0 0.0
    %429 = vmatpush2.xpose.msra.mxu0 0.0
    %430 = vmatprep.subr.mxu0 0.0
    %431 = vmatpush2.xpose.msra.mxu0 0.0
    %432 = vmatprep.subr.mxu0 0.0
    %433 = vmatpush2.xpose.msra.mxu0 0.0
    %434 = vmatprep.subr.mxu0 0.0
    %435 = vmatpush2.xpose.msra.mxu0 0.0
    %436 = vmatprep.subr.mxu0 0.0
    %437 = vmatpush2.xpose.msra.mxu0 0.0
    %438 = vmatprep.subr.mxu0 0.0
    %439 = vmatpush2.xpose.msra.mxu0 0.0
    %440 = vmatprep.mubr.f32.mxu0 0.0
    %441 = vmatmul.mubr.f32.gmra.mxu0 %v153
    %v442 = vpop.f32.mrf.mxu0
    %v443 = vadd.f32 0.0, %v442
    %v444 = vpop.f32.mrf.mxu0
    %445 = vdwg.mxu0
    %v446 = vld [vmem:[%s2] sm:$0xff]
    %v447 = vld [vmem:[%s3] sm:$0x1]
    %448 = vset.pattern.permute.xlu0 0
    %449 = vperm.xlu0 %448, %v446
    %v450 = vpop.permute.xlu0 %449
    %v451 = vlaneseq
    %v452 = vshrl.u32 %v451, 7
    %v453 = vsub.s32 0, %v452
    %v454 = vrot.slane %v447, %v453
    %vm455 = vcmp.eq.s32.totalorder %v450, %v454
    %v456 = vsel %vm455, %v443, -inf
    %457 = vmax.xlane.f32.xlu0 %v456
    %v458 = vpop.xlane.xlu0 %457
    %vm459 = vcmp.gt.f32.partialorder %v458, -inf
    %v460 = vsel %vm459, %v458, 0.0
    %v461 = vsub.f32 %v456, %v460
    %v462 = vmul.f32 %v461, 1.442695
    %v463 = vpow.pop %v462
    %464 = vadd.xlane.f32.xlu0 %v463
    %v465 = vpop.xlane.xlu0 %464
    %vm466 = vcmp.gt.f32.partialorder %v465, 0.0
    %v467 = vsel %vm466, %v465, 1.0
    %v468 = vrcp.pop %v467
    %v469 = vmul.f32 %v463, %v468
    %470 = vst [vmem:[#allocation6] sm:$0xff] %v469
    %471 = vmatprep.subr.mxu0 0.0
    %472 = vmatpush1.msra.mxu0 %v372
    %473 = vmatprep.subr.mxu0 0.0
    %474 = vmatpush1.msra.mxu0 %v366
    %475 = vmatprep.subr.mxu0 0.0
    %476 = vmatpush1.msra.mxu0 %v360
    %477 = vmatprep.subr.mxu0 0.0
    %478 = vmatpush1.msra.mxu0 %v354
    %479 = vmatprep.subr.mxu0 0.0
    %480 = vmatpush1.msra.mxu0 %v348
    %481 = vmatprep.subr.mxu0 0.0
    %482 = vmatpush1.msra.mxu0 %v342
    %483 = vmatprep.subr.mxu0 0.0
    %484 = vmatpush1.msra.mxu0 %v336
    %485 = vmatprep.subr.mxu0 0.0
    %486 = vmatpush1.msra.mxu0 %v330
    %487 = vmatprep.subr.mxu0 0.0
    %488 = vmatpush1.msra.mxu0 %v324
    %489 = vmatprep.subr.mxu0 0.0
    %490 = vmatpush1.msra.mxu0 %v318
    %491 = vmatprep.subr.mxu0 0.0
    %492 = vmatpush1.msra.mxu0 %v312
    %493 = vmatprep.subr.mxu0 0.0
    %494 = vmatpush1.msra.mxu0 %v306
    %495 = vmatprep.subr.mxu0 0.0
    %496 = vmatpush1.msra.mxu0 %v300
    %497 = vmatprep.subr.mxu0 0.0
    %498 = vmatpush1.msra.mxu0 %v294
    %499 = vmatprep.subr.mxu0 0.0
    %500 = vmatpush1.msra.mxu0 %v288
    %501 = vmatprep.subr.mxu0 0.0
    %502 = vmatpush1.msra.mxu0 %v282
    %503 = vmatprep.subr.mxu0 0.0
    %504 = vmatpush2.msra.mxu0 0.0
    %505 = vmatprep.subr.mxu0 0.0
    %506 = vmatpush2.msra.mxu0 0.0
    %507 = vmatprep.subr.mxu0 0.0
    %508 = vmatpush2.msra.mxu0 0.0
    %509 = vmatprep.subr.mxu0 0.0
    %510 = vmatpush2.msra.mxu0 0.0
    %511 = vmatprep.subr.mxu0 0.0
    %512 = vmatpush2.msra.mxu0 0.0
    %513 = vmatprep.subr.mxu0 0.0
    %514 = vmatpush2.msra.mxu0 0.0
    %515 = vmatprep.subr.mxu0 0.0
    %516 = vmatpush2.msra.mxu0 0.0
    %517 = vmatprep.subr.mxu0 0.0
    %518 = vmatpush2.msra.mxu0 0.0
    %519 = vmatprep.subr.mxu0 0.0
    %520 = vmatpush2.msra.mxu0 0.0
    %521 = vmatprep.subr.mxu0 0.0
    %522 = vmatpush2.msra.mxu0 0.0
    %523 = vmatprep.subr.mxu0 0.0
    %524 = vmatpush2.msra.mxu0 0.0
    %525 = vmatprep.subr.mxu0 0.0
    %526 = vmatpush2.msra.mxu0 0.0
    %527 = vmatprep.subr.mxu0 0.0
    %528 = vmatpush2.msra.mxu0 0.0
    %529 = vmatprep.subr.mxu0 0.0
    %530 = vmatpush2.msra.mxu0 0.0
    %531 = vmatprep.subr.mxu0 0.0
    %532 = vmatpush2.msra.mxu0 0.0
    %533 = vmatprep.subr.mxu0 0.0
    %534 = vmatpush2.msra.mxu0 0.0
    %535 = vmatprep.mubr.f32.mxu0 0.0
    %536 = vmatmul.mubr.f32.gmra.mxu0 %v469
    %v537 = vpop.f32.mrf.mxu0
    %v538 = vadd.f32 0.0, %v537
    %v539 = vpop.f32.mrf.mxu0
    %540 = vdwg.mxu0
    %v541 = vld [vmem:[%s5] sm:$0xff]
    %v542 = vld [vmem:[%s5 + $0x8] sm:$0xff]
    %v543 = vld [vmem:[%s5 + $0x10] sm:$0xff]
    %v544 = vld [vmem:[%s5 + $0x18] sm:$0xff]
    %v545 = vld [vmem:[%s5 + $0x20] sm:$0xff]
    %v546 = vld [vmem:[%s5 + $0x28] sm:$0xff]
    %v547 = vld [vmem:[%s5 + $0x30] sm:$0xff]
    %v548 = vld [vmem:[%s5 + $0x38] sm:$0xff]
    %v549 = vld [vmem:[%s5 + $0x40] sm:$0xff]
    %v550 = vld [vmem:[%s5 + $0x48] sm:$0xff]
    %v551 = vld [vmem:[%s5 + $0x50] sm:$0xff]
    %v552 = vld [vmem:[%s5 + $0x58] sm:$0xff]
    %v553 = vld [vmem:[%s5 + $0x60] sm:$0xff]
    %v554 = vld [vmem:[%s5 + $0x68] sm:$0xff]
    %v555 = vld [vmem:[%s5 + $0x70] sm:$0xff]
    %v556 = vld [vmem:[%s5 + $0x78] sm:$0xff]
    %v558 = vlaneseq
    %v559 = vshrl.u32 %v558, 7
    %v560 = vsub.s32 0, %v559
    %v561 = vrot.slane %v75, %v560
    %563 = vmatprep.subr.mxu0 0.0
    %564 = vmatpush1.msra.mxu0 %v556
    %565 = vmatprep.subr.mxu0 0.0
    %566 = vmatpush1.msra.mxu0 %v555
    %567 = vmatprep.subr.mxu0 0.0
    %568 = vmatpush1.msra.mxu0 %v554
    %569 = vmatprep.subr.mxu0 0.0
    %570 = vmatpush1.msra.mxu0 %v553
    %571 = vmatprep.subr.mxu0 0.0
    %572 = vmatpush1.msra.mxu0 %v552
    %573 = vmatprep.subr.mxu0 0.0
    %574 = vmatpush1.msra.mxu0 %v551
    %575 = vmatprep.subr.mxu0 0.0
    %576 = vmatpush1.msra.mxu0 %v550
    %577 = vmatprep.subr.mxu0 0.0
    %578 = vmatpush1.msra.mxu0 %v549
    %579 = vmatprep.subr.mxu0 0.0
    %580 = vmatpush1.msra.mxu0 %v548
    %581 = vmatprep.subr.mxu0 0.0
    %582 = vmatpush1.msra.mxu0 %v547
    %583 = vmatprep.subr.mxu0 0.0
    %584 = vmatpush1.msra.mxu0 %v546
    %585 = vmatprep.subr.mxu0 0.0
    %586 = vmatpush1.msra.mxu0 %v545
    %587 = vmatprep.subr.mxu0 0.0
    %588 = vmatpush1.msra.mxu0 %v544
    %589 = vmatprep.subr.mxu0 0.0
    %590 = vmatpush1.msra.mxu0 %v543
    %591 = vmatprep.subr.mxu0 0.0
    %592 = vmatpush1.msra.mxu0 %v542
    %593 = vmatprep.subr.mxu0 0.0
    %594 = vmatpush1.msra.mxu0 %v541
    %595 = vmatprep.subr.mxu0 0.0
    %596 = vmatpush2.msra.mxu0 0.0
    %597 = vmatprep.subr.mxu0 0.0
    %598 = vmatpush2.msra.mxu0 0.0
    %599 = vmatprep.subr.mxu0 0.0
    %600 = vmatpush2.msra.mxu0 0.0
    %601 = vmatprep.subr.mxu0 0.0
    %602 = vmatpush2.msra.mxu0 0.0
    %603 = vmatprep.subr.mxu0 0.0
    %604 = vmatpush2.msra.mxu0 0.0
    %605 = vmatprep.subr.mxu0 0.0
    %606 = vmatpush2.msra.mxu0 0.0
    %607 = vmatprep.subr.mxu0 0.0
    %608 = vmatpush2.msra.mxu0 0.0
    %609 = vmatprep.subr.mxu0 0.0
    %610 = vmatpush2.msra.mxu0 0.0
    %611 = vmatprep.subr.mxu0 0.0
    %612 = vmatpush2.msra.mxu0 0.0
    %613 = vmatprep.subr.mxu0 0.0
    %614 = vmatpush2.msra.mxu0 0.0
    %615 = vmatprep.subr.mxu0 0.0
    %616 = vmatpush2.msra.mxu0 0.0
    %617 = vmatprep.subr.mxu0 0.0
    %618 = vmatpush2.msra.mxu0 0.0
    %619 = vmatprep.subr.mxu0 0.0
    %620 = vmatpush2.msra.mxu0 0.0
    %621 = vmatprep.subr.mxu0 0.0
    %622 = vmatpush2.msra.mxu0 0.0
    %623 = vmatprep.subr.mxu0 0.0
    %624 = vmatpush2.msra.mxu0 0.0
    %625 = vmatprep.subr.mxu0 0.0
    %626 = vmatpush2.msra.mxu0 0.0
    %627 = vmatprep.mubr.f32.mxu0 0.0
    %628 = vmatmul.mubr.f32.gmra.mxu0 %v538
    %v629 = vpop.f32.mrf.mxu0
    %v630 = vadd.f32 %v561, %v629
    %v631 = vpop.f32.mrf.mxu0
    %632 = vdwg.mxu0
    %633 = vst [vmem:[#allocation5] sm:$0xff] %v630
    // Predicated region
    $region34: #{simple_cross_attention.1} parent=1 // pred_check
      _
    $region35: #{simple_cross_attention.1} parent=1 // pred_check_branch
      %635 = sbr.rel (0) target = $region37
    $region36: #{simple_cross_attention.1} parent=1 // pred_region
      %s637 = ssub.s32 128, 128
      %638 = vsyncadd [#allocation4], %s637
      %s640 = sshll.u32 [#allocation5], 4
      %s641 = int_to_ptr.vmem [resolvable:$true] %s640
      %643 = dma.vmem_to_hbm [thread:$0]  %s641, 128, %s7, [#allocation4]
    $region37: #{simple_cross_attention.1} parent=1 // pred_fallthru
      _
    // Predicated region
    $region38: #{simple_cross_attention.1} parent=1 // pred_check
      _
    $region39: #{simple_cross_attention.1} parent=1 // pred_check_branch
      %645 = sbr.rel (0) target = $region41
    $region40: #{simple_cross_attention.1} parent=1 // pred_region
      %s647 = ssub.s32 128, 128
      %648 = vsyncadd [#allocation7], %s647
      %s650 = sshll.u32 [#allocation6], 4
      %s651 = int_to_ptr.vmem [resolvable:$true] %s650
      %653 = dma.vmem_to_hbm [thread:$0]  %s651, 128, %s8, [#allocation7]
    $region41: #{simple_cross_attention.1} parent=1 // pred_fallthru
      _
    // Predicated region
    $region42: #{simple_cross_attention.1} parent=1 // pred_check
      _
    $region43: #{simple_cross_attention.1} parent=1 // pred_check_branch
      %655 = sbr.rel (0) target = $region45
    $region44: #{simple_cross_attention.1} parent=1 // pred_region
      %656 = dma.done [#allocation4], 128
    $region45: #{simple_cross_attention.1} parent=1 // pred_fallthru
      _
    // Predicated region
    $region46: #{simple_cross_attention.1} parent=1 // pred_check
      _
    $region47: #{simple_cross_attention.1} parent=1 // pred_check_branch
      %658 = sbr.rel (0) target = $region49
    $region48: #{simple_cross_attention.1} parent=1 // pred_region
      %659 = dma.done [#allocation7], 128
    $region49: #{simple_cross_attention.1} parent=1 // pred_fallthru
      _
    %660 = vsyncpa [#allocation3], 1
    %661 = vsyncpa [#allocation4], 1
    %662 = vsyncpa [#allocation7], 1

</llo_original>
